<compile_context>
chip_gen: v7x
topology: tpu7x:2x2x1
jax: 0.10.0
libtpu: 0.0.40
codegen_flags: <defaults>
</compile_context>

<pallas_src>
import functools

import jax
import jax.numpy as jnp
from jax.experimental import pallas as pl
from jax.experimental.pallas import tpu as pltpu

HIDDEN1 = 128          # fc1 output width (already lane-dense)
HIDDEN2 = 64           # fc2 logical output width
LANE = 128             # padded lane width for hidden2 / output
TB_MAX = 1024          # max batch-tile rows per grid step (multiple of 8)
SPLIT_MIN_B = 256      # batches >= this get >= 2 grid steps (v7x megacore)


def _cdiv(a, b):
    return (a + b - 1) // b


def _round_up(n, m):
    return ((n + m - 1) // m) * m


def _tile_rows(B):
    """Balanced batch tiling: multiple of 8, <= TB_MAX, >= 2 tiles for large B."""
    n_tiles = _cdiv(B, TB_MAX)
    if B >= SPLIT_MIN_B:
        n_tiles = max(n_tiles, 2)          # keep both v7x TensorCores busy
    tb = _round_up(_cdiv(B, n_tiles), 8)
    return tb, n_tiles * tb


def qnet_kernel(x_ref, w1_ref, w2_ref, w3_ref, b_ref, out_ref):
    # fc1 + ReLU: bf16 MXU operands, f32 accumulation; bias-add / ReLU stay f32
    # (VPU-friendly on v5e which has no bf16 VPU).
    x = x_ref[...].astype(jnp.bfloat16)
    h1 = jnp.dot(x, w1_ref[...], preferred_element_type=jnp.float32) + b_ref[0:1, :]
    h1 = jnp.maximum(h1, 0.0).astype(jnp.bfloat16)

    # fc2 + ReLU (hidden padded 64 -> 128 lanes; padded columns stay exactly 0).
    h2 = jnp.dot(h1, w2_ref[...], preferred_element_type=jnp.float32) + b_ref[1:2, :]
    h2 = jnp.maximum(h2, 0.0).astype(jnp.bfloat16)

    # fc3 (no activation): lane-dense (TB, 128) bf16 store (unmasked vst);
    # real action columns are sliced out in the wrapper.
    out_ref[...] = (
        jnp.dot(h2, w3_ref[...], preferred_element_type=jnp.float32) + b_ref[2:3, :]
    ).astype(out_ref.dtype)


def prepare_params(params, action_size):
    """One-time (per parameter version) packing — call OUTSIDE the forward path.

    Pads weights to lane-dense shapes, casts matmul weights to bf16 and packs
    all three biases into a single (3, 128) f32 array.

    Invariant: every padded weight column AND padded bias lane is exactly zero,
    so the padded hidden lanes stay exactly 0 through bias-add + ReLU and the
    padded output lanes are exactly 0.  Do not set padding to nonzero or move
    the ReLU without revisiting the kernel.
    """
    assert HIDDEN2 <= LANE and action_size <= LANE
    w1 = params["w1"].astype(jnp.bfloat16)                                     # (S, 128)
    w2 = jnp.zeros((HIDDEN1, LANE), jnp.bfloat16)
    w2 = w2.at[:, :HIDDEN2].set(params["w2"].astype(jnp.bfloat16))             # (128, 128)
    w3 = jnp.zeros((LANE, LANE), jnp.bfloat16)
    w3 = w3.at[:HIDDEN2, :action_size].set(params["w3"].astype(jnp.bfloat16))  # (128, 128)
    b = jnp.zeros((3, LANE), jnp.float32)
    b = b.at[0, :HIDDEN1].set(params["b1"].reshape(-1))
    b = b.at[1, :HIDDEN2].set(params["b2"].reshape(-1))
    b = b.at[2, :action_size].set(params["b3"].reshape(-1))
    return w1, w2, w3, b


@functools.partial(jax.jit, static_argnames=("action_size",))
def qnetwork_forward(state, w1, w2, w3, b, *, action_size):
    """state: (B, state_size) f32.  w1/w2/w3/b: output of prepare_params()."""
    B, state_size = state.shape
    TB, B_pad = _tile_rows(B)
    if B_pad != B:
        state = jnp.pad(state, ((0, B_pad - B), (0, 0)))

    out_padded = pl.pallas_call(
        qnet_kernel,
        out_shape=jax.ShapeDtypeStruct((B_pad, LANE), jnp.bfloat16),  # half the HBM write
        grid_spec=pltpu.PrefetchScalarGridSpec(
            num_scalar_prefetch=0,
            grid=(B_pad // TB,),
            in_specs=[
                pl.BlockSpec((TB, state_size), lambda i: (i, 0)),       # activations tiled
                pl.BlockSpec((state_size, HIDDEN1), lambda i: (0, 0)),  # weights resident
                pl.BlockSpec((HIDDEN1, LANE), lambda i: (0, 0)),
                pl.BlockSpec((LANE, LANE), lambda i: (0, 0)),
                pl.BlockSpec((3, LANE), lambda i: (0, 0)),              # packed biases
            ],
            out_specs=pl.BlockSpec((TB, LANE), lambda i: (i, 0)),
        ),
        compiler_params=pltpu.CompilerParams(
            dimension_semantics=("parallel",),   # shards across v7x's 2 TCs
            vmem_limit_bytes=16 << 20,           # ~2-3 MiB actual need at TB=1024
        ),
    )(state, w1, w2, w3, b)

    # Slice + upcast fuse under this jit; only (B, action_size) is materialized.
    return out_padded[:B, :action_size].astype(jnp.float32)


def init_qnetwork_params(key, state_size, action_size):
    """Deterministic init mirroring PyTorch nn.Linear defaults:
    U(-1/sqrt(fan_in), 1/sqrt(fan_in)) for both weight and bias."""
    dims = [(state_size, HIDDEN1), (HIDDEN1, HIDDEN2), (HIDDEN2, action_size)]
    params = {}
    for idx, (fan_in, fan_out) in enumerate(dims, start=1):
        key, kw, kb = jax.random.split(key, 3)
        bound = 1.0 / jnp.sqrt(jnp.float32(fan_in))
        params[f"w{idx}"] = jax.random.uniform(
            kw, (fan_in, fan_out), jnp.float32, -bound, bound)
        params[f"b{idx}"] = jax.random.uniform(
            kb, (1, fan_out), jnp.float32, -bound, bound)
    return params


def reference_forward(state, params):
    """Pure-JAX reference mimicking the kernel's bf16-operand / f32-accumulate math.
    (Kernel additionally rounds the final output to bf16 — covered by the 1e-2 tol.)"""
    bf = lambda a: a.astype(jnp.bfloat16)
    h = jnp.dot(bf(state), bf(params["w1"]),
                preferred_element_type=jnp.float32) + params["b1"]
    h = jnp.maximum(h, 0.0)
    h = jnp.dot(bf(h), bf(params["w2"]),
                preferred_element_type=jnp.float32) + params["b2"]
    h = jnp.maximum(h, 0.0)
    return jnp.dot(bf(h), bf(params["w3"]),
                   preferred_element_type=jnp.float32) + params["b3"]


if __name__ == "__main__":
    state_size = 8
    action_size = 4
    batch = 2

    key = jax.random.PRNGKey(0)
    key, pkey, xkey = jax.random.split(key, 3)

    params = init_qnetwork_params(pkey, state_size, action_size)
    # Pad / cast / pack the weights ONCE, outside the per-forward path.
    w1, w2, w3, b = prepare_params(params, action_size)

    state = jax.random.normal(xkey, (batch, state_size), jnp.float32)

    out = qnetwork_forward(state, w1, w2, w3, b, action_size=action_size)
    out = jax.block_until_ready(out)

    ref = reference_forward(state, params)
    assert out.shape == (batch, action_size), out.shape
    # NOTE: bf16 weight/activation/output rounding gives ~1e-2 relative error vs
    # a pure-f32 PyTorch QNetwork — a deliberate precision/bandwidth trade-off.
    assert jnp.allclose(out, ref, atol=1e-2, rtol=1e-2), (
        "mismatch vs reference: max abs err = "
        f"{float(jnp.max(jnp.abs(out - ref)))}")

    print("KERNEL_OK")
</pallas_src>

<mosaic_0001>
module attributes {stable_mosaic.version = 11 : i64} {
  func.func @qnet_kernel(%arg0: i32, %arg1: memref<8x8xf32, #tpu.memory_space<vmem>>, %arg2: memref<8x128xbf16, #tpu.memory_space<vmem>>, %arg3: memref<128x128xbf16, #tpu.memory_space<vmem>>, %arg4: memref<128x128xbf16, #tpu.memory_space<vmem>>, %arg5: memref<3x128xf32, #tpu.memory_space<vmem>>, %arg6: memref<8x128xbf16, #tpu.memory_space<vmem>>) attributes {dimension_semantics = [#tpu.dimension_semantics<parallel>], iteration_bounds = array<i64: 1>, scalar_prefetch = 0 : i64, scratch_operands = 0 : i64, tpu.core_type = #tpu.core_type<tc>, window_params = [{transform_indices = @transform_0, window_bounds = array<i64: 8, 8>}, {pipeline_mode = #tpu.pipeline_mode<synchronous>, transform_indices = @transform_1, window_bounds = array<i64: 8, 128>}, {pipeline_mode = #tpu.pipeline_mode<synchronous>, transform_indices = @transform_2, window_bounds = array<i64: 128, 128>}, {pipeline_mode = #tpu.pipeline_mode<synchronous>, transform_indices = @transform_3, window_bounds = array<i64: 128, 128>}, {pipeline_mode = #tpu.pipeline_mode<synchronous>, transform_indices = @transform_4, window_bounds = array<i64: 3, 128>}, {transform_indices = @transform_5, window_bounds = array<i64: 8, 128>}]} {
    %c0 = arith.constant 0 : index
    %c0_0 = arith.constant 0 : index
    %0 = vector.load %arg1[%c0, %c0_0] : memref<8x8xf32, #tpu.memory_space<vmem>>, vector<8x8xf32>
    %1 = arith.truncf %0 : vector<8x8xf32> to vector<8x8xbf16>
    %c0_1 = arith.constant 0 : index
    %c0_2 = arith.constant 0 : index
    %2 = vector.load %arg2[%c0_1, %c0_2] : memref<8x128xbf16, #tpu.memory_space<vmem>>, vector<8x128xbf16>
    %cst = arith.constant dense<0.000000e+00> : vector<8x128xf32>
    %3 = tpu.matmul %1, %2, %cst {dimension_numbers = #tpu.dot_dimension_numbers<[1], [0], [0], [1], [0, 0, 1, 1], [], []>} : vector<8x8xbf16>, vector<8x128xbf16>, vector<8x128xf32> -> vector<8x128xf32>
    %c0_3 = arith.constant 0 : index
    %c0_4 = arith.constant 0 : index
    %4 = vector.load %arg5[%c0_3, %c0_4] : memref<3x128xf32, #tpu.memory_space<vmem>>, vector<1x128xf32>
    %5 = vector.broadcast %4 : vector<1x128xf32> to vector<8x128xf32>
    %6 = arith.addf %3, %5 : vector<8x128xf32>
    %cst_5 = arith.constant 0.000000e+00 : f32
    %7 = vector.broadcast %cst_5 : f32 to vector<8x128xf32>
    %8 = arith.maximumf %6, %7 : vector<8x128xf32>
    %9 = arith.truncf %8 : vector<8x128xf32> to vector<8x128xbf16>
    %c0_6 = arith.constant 0 : index
    %c0_7 = arith.constant 0 : index
    %10 = vector.load %arg3[%c0_6, %c0_7] : memref<128x128xbf16, #tpu.memory_space<vmem>>, vector<128x128xbf16>
    %cst_8 = arith.constant dense<0.000000e+00> : vector<8x128xf32>
    %11 = tpu.matmul %9, %10, %cst_8 {dimension_numbers = #tpu.dot_dimension_numbers<[1], [0], [0], [1], [0, 0, 1, 1], [], []>} : vector<8x128xbf16>, vector<128x128xbf16>, vector<8x128xf32> -> vector<8x128xf32>
    %c1 = arith.constant 1 : index
    %c0_9 = arith.constant 0 : index
    %12 = vector.load %arg5[%c1, %c0_9] : memref<3x128xf32, #tpu.memory_space<vmem>>, vector<1x128xf32>
    %13 = vector.broadcast %12 : vector<1x128xf32> to vector<8x128xf32>
    %14 = arith.addf %11, %13 : vector<8x128xf32>
    %cst_10 = arith.constant 0.000000e+00 : f32
    %15 = vector.broadcast %cst_10 : f32 to vector<8x128xf32>
    %16 = arith.maximumf %14, %15 : vector<8x128xf32>
    %17 = arith.truncf %16 : vector<8x128xf32> to vector<8x128xbf16>
    %c0_11 = arith.constant 0 : index
    %c0_12 = arith.constant 0 : index
    %18 = vector.load %arg4[%c0_11, %c0_12] : memref<128x128xbf16, #tpu.memory_space<vmem>>, vector<128x128xbf16>
    %cst_13 = arith.constant dense<0.000000e+00> : vector<8x128xf32>
    %19 = tpu.matmul %17, %18, %cst_13 {dimension_numbers = #tpu.dot_dimension_numbers<[1], [0], [0], [1], [0, 0, 1, 1], [], []>} : vector<8x128xbf16>, vector<128x128xbf16>, vector<8x128xf32> -> vector<8x128xf32>
    %c2 = arith.constant 2 : index
    %c0_14 = arith.constant 0 : index
    %20 = vector.load %arg5[%c2, %c0_14] : memref<3x128xf32, #tpu.memory_space<vmem>>, vector<1x128xf32>
    %21 = vector.broadcast %20 : vector<1x128xf32> to vector<8x128xf32>
    %22 = arith.addf %19, %21 : vector<8x128xf32>
    %23 = arith.truncf %22 : vector<8x128xf32> to vector<8x128xbf16>
    %c0_15 = arith.constant 0 : index
    %c0_16 = arith.constant 0 : index
    %24 = vector.load %arg6[%c0_15, %c0_16] : memref<8x128xbf16, #tpu.memory_space<vmem>>, vector<8x128xbf16>
    tpu.vector_store %arg6[%c0_15, %c0_16], %23 {strides = array<i32>} : memref<8x128xbf16, #tpu.memory_space<vmem>>, vector<8x128xbf16>,
    return
  }
  func.func @transform_0(%arg0: i32) -> (i32, i32) {
    %c0_i32 = arith.constant 0 : i32
    %c0_i32_0 = arith.constant 0 : i32
    return %arg0, %c0_i32 : i32, i32
  }
  func.func @transform_1(%arg0: i32) -> (i32, i32) {
    %c0_i32 = arith.constant 0 : i32
    %c0_i32_0 = arith.constant 0 : i32
    %c0_i32_1 = arith.constant 0 : i32
    return %c0_i32, %c0_i32_0 : i32, i32
  }
  func.func @transform_2(%arg0: i32) -> (i32, i32) {
    %c0_i32 = arith.constant 0 : i32
    %c0_i32_0 = arith.constant 0 : i32
    %c0_i32_1 = arith.constant 0 : i32
    return %c0_i32, %c0_i32_0 : i32, i32
  }
  func.func @transform_3(%arg0: i32) -> (i32, i32) {
    %c0_i32 = arith.constant 0 : i32
    %c0_i32_0 = arith.constant 0 : i32
    %c0_i32_1 = arith.constant 0 : i32
    return %c0_i32, %c0_i32_0 : i32, i32
  }
  func.func @transform_4(%arg0: i32) -> (i32, i32) {
    %c0_i32 = arith.constant 0 : i32
    %c0_i32_0 = arith.constant 0 : i32
    %c0_i32_1 = arith.constant 0 : i32
    return %c0_i32, %c0_i32_0 : i32, i32
  }
  func.func @transform_5(%arg0: i32) -> (i32, i32) {
    %c0_i32 = arith.constant 0 : i32
    %c0_i32_0 = arith.constant 0 : i32
    return %arg0, %c0_i32 : i32, i32
  }
}

</mosaic_0001>

<llo_original>
// kernel: qnetwork_forward.1
$region0: #{qnetwork_forward.1}
  #allocation0 [shape = 'u32[]', space=smem, size = 0x4, offset = 0x4, fixed_abs, tag = 'smem constant byte address 0x4 - core index']
  #allocation1 [shape = 'u32[144,128]{1,0:T(1,128)}', space=vmem, size = 0x12000, scoped, tag = 'internal scratch']
  %s0 = inlined_call_operand.vmem [shape: f32[8,8], index: 0, kind: input, shape index: {}]
  %s1 = inlined_call_operand.vmem [shape: bf16[8,128], index: 1, kind: input, shape index: {}]
  %s2 = inlined_call_operand.hbm [shape: bf16[128,128], index: 2, kind: input, shape index: {}]
  %s3 = inlined_call_operand.hbm [shape: bf16[128,128], index: 3, kind: input, shape index: {}]
  %s4 = inlined_call_operand.vmem [shape: f32[3,128], index: 4, kind: input, shape index: {}]
  %s5 = inlined_call_operand.vmem [shape: bf16[8,128], index: 5, kind: output, shape index: {}]
  %s6 = sld [smem:[#allocation0]]
  $region38: #{qnetwork_forward.1} parent=0
    _
  %s8 = ssub.s32 1, %s6
  %s9 = scalar_select 0, %s8, %s6
  $region1: #{qnetwork_forward.1} parent=0
    #allocation2 [shape = 'u8[32768]{0}', space=vmem, size = 0x8000, scoped, tag = 'input window, operand 2, single buffered']
    #allocation3 [shape = 's32[1]{0}', space=sflag, size = 0x4, scoped, tag = 'scoped memory for qnetwork_forward.1']
    #allocation4 [shape = 'u8[32768]{0}', space=vmem, size = 0x8000, scoped, tag = 'input window, operand 3, single buffered']
    #allocation5 [shape = 's32[1]{0}', space=sflag, size = 0x4, scoped, tag = 'scoped memory for qnetwork_forward.1']
    %10 = vsyncpa [#allocation3], 0
    %11 = vsyncpa [#allocation5], 0
    // Predicated region
    $region2: #{qnetwork_forward.1} parent=1 // pred_check
      _
    $region3: #{qnetwork_forward.1} parent=1 // pred_check_branch
      %13 = sbr.rel (0) target = $region5
    $region4: #{qnetwork_forward.1} parent=1 // pred_region
      _
    $region5: #{qnetwork_forward.1} parent=1 // pred_fallthru
      _
    // Predicated region
    $region6: #{qnetwork_forward.1} parent=1 // pred_check
      _
    $region7: #{qnetwork_forward.1} parent=1 // pred_check_branch
      %15 = sbr.rel (0) target = $region9
    $region8: #{qnetwork_forward.1} parent=1 // pred_region
      _
    $region9: #{qnetwork_forward.1} parent=1 // pred_fallthru
      _
    // Predicated region
    $region10: #{qnetwork_forward.1} parent=1 // pred_check
      _
    $region11: #{qnetwork_forward.1} parent=1 // pred_check_branch
      %17 = sbr.rel (0) target = $region13
    $region12: #{qnetwork_forward.1} parent=1 // pred_region
      %s19 = ssub.s32 1024, 1024
      %20 = vsyncadd [#allocation3], %s19
      %s21 = sshll.u32 [#allocation2], 4
      %s22 = int_to_ptr.vmem [resolvable:$true] %s21
      %27 = dma.hbm_to_vmem [thread:$0]  %s2, 1024, %s22, [#allocation3], 64, 64, 4
    $region13: #{qnetwork_forward.1} parent=1 // pred_fallthru
      _
    // Predicated region
    $region14: #{qnetwork_forward.1} parent=1 // pred_check
      _
    $region15: #{qnetwork_forward.1} parent=1 // pred_check_branch
      %29 = sbr.rel (0) target = $region17
    $region16: #{qnetwork_forward.1} parent=1 // pred_region
      %s31 = ssub.s32 1024, 1024
      %32 = vsyncadd [#allocation5], %s31
      %s33 = sshll.u32 [#allocation4], 4
      %s34 = int_to_ptr.vmem [resolvable:$true] %s33
      %39 = dma.hbm_to_vmem [thread:$0]  %s3, 1024, %s34, [#allocation5], 64, 64, 4
    $region17: #{qnetwork_forward.1} parent=1 // pred_fallthru
      _
    // Predicated region
    $region18: #{qnetwork_forward.1} parent=1 // pred_check
      _
    $region19: #{qnetwork_forward.1} parent=1 // pred_check_branch
      %41 = sbr.rel (0) target = $region21
    $region20: #{qnetwork_forward.1} parent=1 // pred_region
      _
    $region21: #{qnetwork_forward.1} parent=1 // pred_fallthru
      _
    // Predicated region
    $region22: #{qnetwork_forward.1} parent=1 // pred_check
      _
    $region23: #{qnetwork_forward.1} parent=1 // pred_check_branch
      %43 = sbr.rel (0) target = $region25
    $region24: #{qnetwork_forward.1} parent=1 // pred_region
      %44 = dma.done [#allocation3], 1024
    $region25: #{qnetwork_forward.1} parent=1 // pred_fallthru
      _
    // Predicated region
    $region26: #{qnetwork_forward.1} parent=1 // pred_check
      _
    $region27: #{qnetwork_forward.1} parent=1 // pred_check_branch
      %46 = sbr.rel (0) target = $region29
    $region28: #{qnetwork_forward.1} parent=1 // pred_region
      %47 = dma.done [#allocation5], 1024
    $region29: #{qnetwork_forward.1} parent=1 // pred_fallthru
      _
    %v49 = vld [vmem:[%s0] sm:$0xff]
    %v50 = vpack.c.bf16 %v49, %v49
    %v51 = vld [vmem:[%s1] sm:$0xf]
    %v52 = vld [vmem:[%s4] sm:$0x1]
    %v53 = vlaneseq
    %v54 = vshrl.u32 %v53, 7
    %v55 = vsub.s32 0, %v54
    %v56 = vrot.slane %v52, %v55
    %vm57 = vcmask 64512
    %v59 = vsel %vm57, %v50, 0
    %vm61 = vcmask 1043456
    %v63 = vsel %vm61, %v51, 0
    %65 = vmatprep.subr.bf16.mxu0 0
    %66 = vmatpush1.bf16.msra.mxu0 %v63
    %67 = vmatprep.subr.bf16.mxu0 0
    %68 = vmatpush1.bf16.msra.mxu0 0
    %69 = vmatprep.subr.bf16.mxu0 0
    %70 = vmatpush1.bf16.msra.mxu0 0
    %71 = vmatprep.subr.bf16.mxu0 0
    %72 = vmatpush1.bf16.msra.mxu0 0
    %73 = vmatprep.subr.bf16.mxu0 0
    %74 = vmatpush1.bf16.msra.mxu0 0
    %75 = vmatprep.subr.bf16.mxu0 0
    %76 = vmatpush1.bf16.msra.mxu0 0
    %77 = vmatprep.subr.bf16.mxu0 0
    %78 = vmatpush1.bf16.msra.mxu0 0
    %79 = vmatprep.subr.bf16.mxu0 0
    %80 = vmatpush1.bf16.msra.mxu0 0
    %81 = vmatprep.subr.bf16.mxu0 0
    %82 = vmatpush1.bf16.msra.mxu0 0
    %83 = vmatprep.subr.bf16.mxu0 0
    %84 = vmatpush1.bf16.msra.mxu0 0
    %85 = vmatprep.subr.bf16.mxu0 0
    %86 = vmatpush1.bf16.msra.mxu0 0
    %87 = vmatprep.subr.bf16.mxu0 0
    %88 = vmatpush1.bf16.msra.mxu0 0
    %89 = vmatprep.subr.bf16.mxu0 0
    %90 = vmatpush1.bf16.msra.mxu0 0
    %91 = vmatprep.subr.bf16.mxu0 0
    %92 = vmatpush1.bf16.msra.mxu0 0
    %93 = vmatprep.subr.bf16.mxu0 0
    %94 = vmatpush1.bf16.msra.mxu0 0
    %95 = vmatprep.subr.bf16.mxu0 0
    %96 = vmatpush1.bf16.msra.mxu0 0
    %97 = vmatprep.mubr.bf16.mxu0 0
    %98 = vmatmul.mubr.bf16.gmra.mrb[0].mxu0 %v59
    %v99 = vpop.f32.mrb[0].mxu0
    %v100 = vadd.f32 %v56, %v99
    %v101 = vpop.f32.mrb[0].mxu0
    %v102 = vpop.f32.mrb[0].mxu0
    %v103 = vpop.f32.mrb[0].mxu0
    %104 = vdwg.mxu0
    %v105 = vmax.f32 %v100, 0.0
    %v106 = vpack.c.bf16 %v105, %v105
    %v107 = vld [vmem:[#allocation2] sm:$0xf]
    %v108 = vld [vmem:[#allocation2 + $0x4] sm:$0xf]
    %v109 = vld [vmem:[#allocation2 + $0x8] sm:$0xf]
    %v110 = vld [vmem:[#allocation2 + $0xc] sm:$0xf]
    %v111 = vld [vmem:[#allocation2 + $0x10] sm:$0xf]
    %v112 = vld [vmem:[#allocation2 + $0x14] sm:$0xf]
    %v113 = vld [vmem:[#allocation2 + $0x18] sm:$0xf]
    %v114 = vld [vmem:[#allocation2 + $0x1c] sm:$0xf]
    %v115 = vld [vmem:[#allocation2 + $0x20] sm:$0xf]
    %v116 = vld [vmem:[#allocation2 + $0x24] sm:$0xf]
    %v117 = vld [vmem:[#allocation2 + $0x28] sm:$0xf]
    %v118 = vld [vmem:[#allocation2 + $0x2c] sm:$0xf]
    %v119 = vld [vmem:[#allocation2 + $0x30] sm:$0xf]
    %v120 = vld [vmem:[#allocation2 + $0x34] sm:$0xf]
    %v121 = vld [vmem:[#allocation2 + $0x38] sm:$0xf]
    %v122 = vld [vmem:[#allocation2 + $0x3c] sm:$0xf]
    %v123 = vld [vmem:[%s4 + $0x1] sm:$0x1]
    %v124 = vlaneseq
    %v125 = vshrl.u32 %v124, 7
    %v126 = vsub.s32 0, %v125
    %v127 = vrot.slane %v123, %v126
    %v144 = vunpack.c.l.b16 %v107
    %v145 = vunpack.c.l.b16 %v108
    %v146 = vunpack.c.l.b16 %v109
    %v147 = vunpack.c.l.b16 %v110
    %v148 = vunpack.c.l.b16 %v111
    %v149 = vunpack.c.l.b16 %v112
    %v150 = vunpack.c.l.b16 %v113
    %v151 = vunpack.c.l.b16 %v114
    %v152 = vunpack.c.l.b16 %v115
    %v153 = vunpack.c.l.b16 %v116
    %v154 = vunpack.c.l.b16 %v117
    %v155 = vunpack.c.l.b16 %v118
    %v156 = vunpack.c.l.b16 %v119
    %v157 = vunpack.c.l.b16 %v120
    %v158 = vunpack.c.l.b16 %v121
    %v159 = vunpack.c.l.b16 %v122
    %v160 = vpack.c.b16 %v145, %v144
    %v161 = vpack.c.b16 %v147, %v146
    %v162 = vpack.c.b16 %v149, %v148
    %v163 = vpack.c.b16 %v151, %v150
    %v164 = vpack.c.b16 %v153, %v152
    %v165 = vpack.c.b16 %v155, %v154
    %v166 = vpack.c.b16 %v157, %v156
    %v167 = vpack.c.b16 %v159, %v158
    %176 = vmatprep.subr.bf16.mxu0 0
    %177 = vmatpush1.bf16.msra.mxu0 %v160
    %178 = vmatprep.subr.bf16.mxu0 0
    %179 = vmatpush1.bf16.msra.mxu0 %v161
    %180 = vmatprep.subr.bf16.mxu0 0
    %181 = vmatpush1.bf16.msra.mxu0 %v162
    %182 = vmatprep.subr.bf16.mxu0 0
    %183 = vmatpush1.bf16.msra.mxu0 %v163
    %184 = vmatprep.subr.bf16.mxu0 0
    %185 = vmatpush1.bf16.msra.mxu0 %v164
    %186 = vmatprep.subr.bf16.mxu0 0
    %187 = vmatpush1.bf16.msra.mxu0 %v165
    %188 = vmatprep.subr.bf16.mxu0 0
    %189 = vmatpush1.bf16.msra.mxu0 %v166
    %190 = vmatprep.subr.bf16.mxu0 0
    %191 = vmatpush1.bf16.msra.mxu0 %v167
    %192 = vmatprep.subr.bf16.mxu0 0
    %193 = vmatpush1.bf16.msra.mxu0 0
    %194 = vmatprep.subr.bf16.mxu0 0
    %195 = vmatpush1.bf16.msra.mxu0 0
    %196 = vmatprep.subr.bf16.mxu0 0
    %197 = vmatpush1.bf16.msra.mxu0 0
    %198 = vmatprep.subr.bf16.mxu0 0
    %199 = vmatpush1.bf16.msra.mxu0 0
    %200 = vmatprep.subr.bf16.mxu0 0
    %201 = vmatpush1.bf16.msra.mxu0 0
    %202 = vmatprep.subr.bf16.mxu0 0
    %203 = vmatpush1.bf16.msra.mxu0 0
    %204 = vmatprep.subr.bf16.mxu0 0
    %205 = vmatpush1.bf16.msra.mxu0 0
    %206 = vmatprep.subr.bf16.mxu0 0
    %207 = vmatpush1.bf16.msra.mxu0 0
    %208 = vmatprep.mubr.bf16.mxu0 0
    %209 = vmatmul.mubr.bf16.gmra.mrb[0].mxu0 %v106
    %v210 = vpop.f32.mrb[0].mxu0
    %v211 = vadd.f32 %v127, %v210
    %v212 = vpop.f32.mrb[0].mxu0
    %v213 = vpop.f32.mrb[0].mxu0
    %v214 = vpop.f32.mrb[0].mxu0
    %215 = vdwg.mxu0
    %v216 = vmax.f32 %v211, 0.0
    %v217 = vpack.c.bf16 %v216, %v216
    %v218 = vld [vmem:[#allocation4] sm:$0xf]
    %v219 = vld [vmem:[#allocation4 + $0x4] sm:$0xf]
    %v220 = vld [vmem:[#allocation4 + $0x8] sm:$0xf]
    %v221 = vld [vmem:[#allocation4 + $0xc] sm:$0xf]
    %v222 = vld [vmem:[#allocation4 + $0x10] sm:$0xf]
    %v223 = vld [vmem:[#allocation4 + $0x14] sm:$0xf]
    %v224 = vld [vmem:[#allocation4 + $0x18] sm:$0xf]
    %v225 = vld [vmem:[#allocation4 + $0x1c] sm:$0xf]
    %v226 = vld [vmem:[#allocation4 + $0x20] sm:$0xf]
    %v227 = vld [vmem:[#allocation4 + $0x24] sm:$0xf]
    %v228 = vld [vmem:[#allocation4 + $0x28] sm:$0xf]
    %v229 = vld [vmem:[#allocation4 + $0x2c] sm:$0xf]
    %v230 = vld [vmem:[#allocation4 + $0x30] sm:$0xf]
    %v231 = vld [vmem:[#allocation4 + $0x34] sm:$0xf]
    %v232 = vld [vmem:[#allocation4 + $0x38] sm:$0xf]
    %v233 = vld [vmem:[#allocation4 + $0x3c] sm:$0xf]
    %v234 = vld [vmem:[%s4 + $0x2] sm:$0x1]
    %v235 = vlaneseq
    %v236 = vshrl.u32 %v235, 7
    %v237 = vsub.s32 0, %v236
    %v238 = vrot.slane %v234, %v237
    %v255 = vunpack.c.l.b16 %v218
    %v256 = vunpack.c.l.b16 %v219
    %v257 = vunpack.c.l.b16 %v220
    %v258 = vunpack.c.l.b16 %v221
    %v259 = vunpack.c.l.b16 %v222
    %v260 = vunpack.c.l.b16 %v223
    %v261 = vunpack.c.l.b16 %v224
    %v262 = vunpack.c.l.b16 %v225
    %v263 = vunpack.c.l.b16 %v226
    %v264 = vunpack.c.l.b16 %v227
    %v265 = vunpack.c.l.b16 %v228
    %v266 = vunpack.c.l.b16 %v229
    %v267 = vunpack.c.l.b16 %v230
    %v268 = vunpack.c.l.b16 %v231
    %v269 = vunpack.c.l.b16 %v232
    %v270 = vunpack.c.l.b16 %v233
    %v271 = vpack.c.b16 %v256, %v255
    %v272 = vpack.c.b16 %v258, %v257
    %v273 = vpack.c.b16 %v260, %v259
    %v274 = vpack.c.b16 %v262, %v261
    %v275 = vpack.c.b16 %v264, %v263
    %v276 = vpack.c.b16 %v266, %v265
    %v277 = vpack.c.b16 %v268, %v267
    %v278 = vpack.c.b16 %v270, %v269
    %287 = vmatprep.subr.bf16.mxu0 0
    %288 = vmatpush1.bf16.msra.mxu0 %v271
    %289 = vmatprep.subr.bf16.mxu0 0
    %290 = vmatpush1.bf16.msra.mxu0 %v272
    %291 = vmatprep.subr.bf16.mxu0 0
    %292 = vmatpush1.bf16.msra.mxu0 %v273
    %293 = vmatprep.subr.bf16.mxu0 0
    %294 = vmatpush1.bf16.msra.mxu0 %v274
    %295 = vmatprep.subr.bf16.mxu0 0
    %296 = vmatpush1.bf16.msra.mxu0 %v275
    %297 = vmatprep.subr.bf16.mxu0 0
    %298 = vmatpush1.bf16.msra.mxu0 %v276
    %299 = vmatprep.subr.bf16.mxu0 0
    %300 = vmatpush1.bf16.msra.mxu0 %v277
    %301 = vmatprep.subr.bf16.mxu0 0
    %302 = vmatpush1.bf16.msra.mxu0 %v278
    %303 = vmatprep.subr.bf16.mxu0 0
    %304 = vmatpush1.bf16.msra.mxu0 0
    %305 = vmatprep.subr.bf16.mxu0 0
    %306 = vmatpush1.bf16.msra.mxu0 0
    %307 = vmatprep.subr.bf16.mxu0 0
    %308 = vmatpush1.bf16.msra.mxu0 0
    %309 = vmatprep.subr.bf16.mxu0 0
    %310 = vmatpush1.bf16.msra.mxu0 0
    %311 = vmatprep.subr.bf16.mxu0 0
    %312 = vmatpush1.bf16.msra.mxu0 0
    %313 = vmatprep.subr.bf16.mxu0 0
    %314 = vmatpush1.bf16.msra.mxu0 0
    %315 = vmatprep.subr.bf16.mxu0 0
    %316 = vmatpush1.bf16.msra.mxu0 0
    %317 = vmatprep.subr.bf16.mxu0 0
    %318 = vmatpush1.bf16.msra.mxu0 0
    %319 = vmatprep.mubr.bf16.mxu0 0
    %320 = vmatmul.mubr.bf16.gmra.mrb[0].mxu0 %v217
    %v321 = vpop.f32.mrb[0].mxu0
    %v322 = vadd.f32 %v238, %v321
    %v323 = vpop.f32.mrb[0].mxu0
    %v324 = vpop.f32.mrb[0].mxu0
    %v325 = vpop.f32.mrb[0].mxu0
    %326 = vdwg.mxu0
    %v327 = vpack.c.bf16 %v322, %v322
    %328 = vst [vmem:[%s5] sm:$0xf] %v327
    // Predicated region
    $region30: #{qnetwork_forward.1} parent=1 // pred_check
      _
    $region31: #{qnetwork_forward.1} parent=1 // pred_check_branch
      %330 = sbr.rel (0) target = $region33
    $region32: #{qnetwork_forward.1} parent=1 // pred_region
      _
    $region33: #{qnetwork_forward.1} parent=1 // pred_fallthru
      _
    // Predicated region
    $region34: #{qnetwork_forward.1} parent=1 // pred_check
      _
    $region35: #{qnetwork_forward.1} parent=1 // pred_check_branch
      %332 = sbr.rel (0) target = $region37
    $region36: #{qnetwork_forward.1} parent=1 // pred_region
      _
    $region37: #{qnetwork_forward.1} parent=1 // pred_fallthru
      _
    %333 = vsyncpa [#allocation3], 1
    %334 = vsyncpa [#allocation5], 1

</llo_original>
